<compile_context>
chip_gen: v7x
topology: tpu7x:2x2x1
jax: 0.10.0
libtpu: 0.0.40
codegen_flags: <defaults>
</compile_context>

<pallas_src>
import jax
import jax.numpy as jnp
from jax.experimental import pallas as pl
from jax.experimental.pallas import tpu as pltpu


def expert_kernel(x_ref, w1_ref, b1_ref, w2_ref, b2_ref, o_ref):
    # Layer 1: (tb, d0) @ (d0, d1) on the MXU, bf16 inputs, f32 accumulation.
    h = jnp.dot(x_ref[...], w1_ref[...], preferred_element_type=jnp.float32)
    # Bias + ReLU in f32 on the VPU (v5e VPU has no bf16 path).
    h = jnp.maximum(h + b1_ref[...], 0.0)
    # Layer 2: cast activations to bf16 to feed the MXU at native rate.
    out = jnp.dot(h.astype(w2_ref.dtype), w2_ref[...],
                  preferred_element_type=jnp.float32)
    # TODO(synk): d2 < 128 means a masked (non lane-dense) store; acceptable here
    # since the HBM block is still contiguous, revisit if d2 grows.
    o_ref[...] = (out + b2_ref[...]).astype(o_ref.dtype)


def _round_up(n, m):
    return ((n + m - 1) // m) * m


def _choose_tile(B):
    """Largest tile that keeps >=2 grid steps (v7x megacore) and 8-row alignment."""
    if B < 16:
        return _round_up(max(B, 1), 8)          # single whole-batch tile
    half = _round_up(pl.cdiv(B, 2), 8)          # two parallel grid steps
    return min(1024, half)                      # cap VMEM per step


def _build_expert_call(Bp, d0, d1, d2, tile_b, single_buffer_weights):
    if single_buffer_weights:
        def wspec(shape):
            return pl.BlockSpec(shape, lambda i: (0, 0),
                                pipeline_mode=pl.Buffered(1))
    else:
        def wspec(shape):
            return pl.BlockSpec(shape, lambda i: (0, 0))

    cost = pl.CostEstimate(
        flops=2 * Bp * (d0 * d1 + d1 * d2),
        transcendentals=0,
        bytes_accessed=(Bp * d0 * 2 + d0 * d1 * 2 + d1 * d2 * 2
                        + d1 * 4 + d2 * 4 + Bp * d2 * 4),
    )

    return pl.pallas_call(
        expert_kernel,
        out_shape=jax.ShapeDtypeStruct((Bp, d2), jnp.float32),
        grid_spec=pltpu.PrefetchScalarGridSpec(
            num_scalar_prefetch=0,
            grid=(Bp // tile_b,),
            in_specs=[
                pl.BlockSpec((tile_b, d0), lambda i: (i, 0)),  # x tile over batch
                wspec((d0, d1)),                               # W1 (resident)
                wspec((1, d1)),                                # b1
                wspec((d1, d2)),                               # W2 (resident)
                wspec((1, d2)),                                # b2
            ],
            out_specs=pl.BlockSpec((tile_b, d2), lambda i: (i, 0)),
        ),
        compiler_params=pltpu.CompilerParams(
            dimension_semantics=("parallel",),                 # shard batch over TCs
        ),
        cost_estimate=cost,
    )


def expert_forward(x, w1, b1, w2, b2, *, tile_b=None):
    """Fused MLP expert forward pass.

    x  : (B, d0) float32
    w1 : (d0, d1)   b1 : (1, d1)
    w2 : (d1, d2)   b2 : (1, d2)
    returns (B, d2) float32
    """
    B, d0 = x.shape
    d1 = w1.shape[1]
    d2 = w2.shape[1]

    if tile_b is None:
        tile_b = _choose_tile(B)

    # Pad batch to a tile multiple (padded rows are sliced off at the end).
    Bp = _round_up(B, tile_b)
    if Bp != B:
        x = jnp.pad(x, ((0, Bp - B), (0, 0)))

    # bf16 activations/weights -> half the HBM/VMEM bytes and native MXU rate.
    x_bf = x.astype(jnp.bfloat16)
    w1_bf = w1.astype(jnp.bfloat16)
    w2_bf = w2.astype(jnp.bfloat16)
    b1_f32 = b1.astype(jnp.float32)
    b2_f32 = b2.astype(jnp.float32)

    try:
        call = _build_expert_call(Bp, d0, d1, d2, tile_b,
                                  single_buffer_weights=True)
        out = call(x_bf, w1_bf, b1_f32, w2_bf, b2_f32)
    except Exception:
        # Fallback if this Pallas build rejects pipeline_mode on BlockSpec.
        call = _build_expert_call(Bp, d0, d1, d2, tile_b,
                                  single_buffer_weights=False)
        out = call(x_bf, w1_bf, b1_f32, w2_bf, b2_f32)

    return out[:B] if Bp != B else out


def init_expert_params(key, dims):
    """PyTorch-Linear-style init: U(-1/sqrt(fan_in), 1/sqrt(fan_in)).

    Weights are returned pre-transposed to (in_features, out_features).
    """
    d0, d1, d2 = dims
    k1, k2, k3, k4 = jax.random.split(key, 4)
    bound1 = 1.0 / jnp.sqrt(jnp.float32(d0))
    bound2 = 1.0 / jnp.sqrt(jnp.float32(d1))
    w1 = jax.random.uniform(k1, (d0, d1), jnp.float32, -bound1, bound1)
    b1 = jax.random.uniform(k2, (1, d1), jnp.float32, -bound1, bound1)
    w2 = jax.random.uniform(k3, (d1, d2), jnp.float32, -bound2, bound2)
    b2 = jax.random.uniform(k4, (1, d2), jnp.float32, -bound2, bound2)
    return w1, b1, w2, b2


if __name__ == "__main__":
    # Small shapes consistent with the module: Expert(dims=[32, 64, 16]).
    dims = (32, 64, 16)
    B = 256  # -> tile_b = 128, grid = (2,) parallel (both TCs on v7x)

    key = jax.random.PRNGKey(0)
    kx, kp = jax.random.split(key)
    x = jax.random.normal(kx, (B, dims[0]), jnp.float32)
    w1, b1, w2, b2 = init_expert_params(kp, dims)

    out = expert_forward(x, w1, b1, w2, b2)
    out = jax.block_until_ready(out)
    assert out.shape == (B, dims[2])

    # Reference 1: same bf16-input semantics (tight tolerance).
    xb, w1b, w2b = (x.astype(jnp.bfloat16), w1.astype(jnp.bfloat16),
                    w2.astype(jnp.bfloat16))
    h_ref = jnp.maximum(
        jnp.dot(xb, w1b, preferred_element_type=jnp.float32) + b1, 0.0)
    ref_bf = jnp.dot(h_ref.astype(jnp.bfloat16), w2b,
                     preferred_element_type=jnp.float32) + b2
    assert jnp.allclose(out, ref_bf, atol=1e-2, rtol=1e-2)

    # Reference 2: pure f32 forward (loose tolerance for bf16 input rounding).
    ref_f32 = jnp.maximum(x @ w1 + b1, 0.0) @ w2 + b2
    assert jnp.allclose(out, ref_f32, atol=6e-2, rtol=6e-2)

    print("KERNEL_OK")
</pallas_src>

<mosaic_0001>
module attributes {stable_mosaic.version = 11 : i64} {
  func.func @expert_kernel(%arg0: i32, %arg1: memref<128x32xbf16, #tpu.memory_space<vmem>>, %arg2: memref<32x64xbf16, #tpu.memory_space<vmem>>, %arg3: memref<1x64xf32, #tpu.memory_space<vmem>>, %arg4: memref<64x16xbf16, #tpu.memory_space<vmem>>, %arg5: memref<1x16xf32, #tpu.memory_space<vmem>>, %arg6: memref<128x16xf32, #tpu.memory_space<vmem>>) attributes {dimension_semantics = [#tpu.dimension_semantics<parallel>], iteration_bounds = array<i64: 2>, scalar_prefetch = 0 : i64, scratch_operands = 0 : i64, tpu.core_type = #tpu.core_type<tc>, window_params = [{transform_indices = @transform_0, window_bounds = array<i64: 128, 32>}, {pipeline_mode = #tpu.pipeline_mode<synchronous>, transform_indices = @transform_1, window_bounds = array<i64: 32, 64>}, {pipeline_mode = #tpu.pipeline_mode<synchronous>, transform_indices = @transform_2, window_bounds = array<i64: 1, 64>}, {pipeline_mode = #tpu.pipeline_mode<synchronous>, transform_indices = @transform_3, window_bounds = array<i64: 64, 16>}, {pipeline_mode = #tpu.pipeline_mode<synchronous>, transform_indices = @transform_4, window_bounds = array<i64: 1, 16>}, {transform_indices = @transform_5, window_bounds = array<i64: 128, 16>}]} {
    %c0 = arith.constant 0 : index
    %c0_0 = arith.constant 0 : index
    %0 = vector.load %arg1[%c0, %c0_0] : memref<128x32xbf16, #tpu.memory_space<vmem>>, vector<128x32xbf16>
    %c0_1 = arith.constant 0 : index
    %c0_2 = arith.constant 0 : index
    %1 = vector.load %arg2[%c0_1, %c0_2] : memref<32x64xbf16, #tpu.memory_space<vmem>>, vector<32x64xbf16>
    %cst = arith.constant dense<0.000000e+00> : vector<128x64xf32>
    %2 = tpu.matmul %0, %1, %cst {dimension_numbers = #tpu.dot_dimension_numbers<[1], [0], [0], [1], [0, 0, 1, 1], [], []>} : vector<128x32xbf16>, vector<32x64xbf16>, vector<128x64xf32> -> vector<128x64xf32>
    %c0_3 = arith.constant 0 : index
    %c0_4 = arith.constant 0 : index
    %3 = vector.load %arg3[%c0_3, %c0_4] : memref<1x64xf32, #tpu.memory_space<vmem>>, vector<1x64xf32>
    %4 = vector.broadcast %3 : vector<1x64xf32> to vector<128x64xf32>
    %5 = arith.addf %2, %4 : vector<128x64xf32>
    %cst_5 = arith.constant 0.000000e+00 : f32
    %6 = vector.broadcast %cst_5 : f32 to vector<128x64xf32>
    %7 = arith.maximumf %5, %6 : vector<128x64xf32>
    %8 = arith.truncf %7 : vector<128x64xf32> to vector<128x64xbf16>
    %c0_6 = arith.constant 0 : index
    %c0_7 = arith.constant 0 : index
    %9 = vector.load %arg4[%c0_6, %c0_7] : memref<64x16xbf16, #tpu.memory_space<vmem>>, vector<64x16xbf16>
    %cst_8 = arith.constant dense<0.000000e+00> : vector<128x16xf32>
    %10 = tpu.matmul %8, %9, %cst_8 {dimension_numbers = #tpu.dot_dimension_numbers<[1], [0], [0], [1], [0, 0, 1, 1], [], []>} : vector<128x64xbf16>, vector<64x16xbf16>, vector<128x16xf32> -> vector<128x16xf32>
    %c0_9 = arith.constant 0 : index
    %c0_10 = arith.constant 0 : index
    %11 = vector.load %arg5[%c0_9, %c0_10] : memref<1x16xf32, #tpu.memory_space<vmem>>, vector<1x16xf32>
    %12 = vector.broadcast %11 : vector<1x16xf32> to vector<128x16xf32>
    %13 = arith.addf %10, %12 : vector<128x16xf32>
    %c0_11 = arith.constant 0 : index
    %c0_12 = arith.constant 0 : index
    %14 = vector.load %arg6[%c0_11, %c0_12] : memref<128x16xf32, #tpu.memory_space<vmem>>, vector<128x16xf32>
    tpu.vector_store %arg6[%c0_11, %c0_12], %13 {strides = array<i32>} : memref<128x16xf32, #tpu.memory_space<vmem>>, vector<128x16xf32>,
    return
  }
  func.func @transform_0(%arg0: i32) -> (i32, i32) {
    %c0_i32 = arith.constant 0 : i32
    %c0_i32_0 = arith.constant 0 : i32
    return %arg0, %c0_i32 : i32, i32
  }
  func.func @transform_1(%arg0: i32) -> (i32, i32) {
    %c0_i32 = arith.constant 0 : i32
    %c0_i32_0 = arith.constant 0 : i32
    %c0_i32_1 = arith.constant 0 : i32
    return %c0_i32, %c0_i32_0 : i32, i32
  }
  func.func @transform_2(%arg0: i32) -> (i32, i32) {
    %c0_i32 = arith.constant 0 : i32
    %c0_i32_0 = arith.constant 0 : i32
    %c0_i32_1 = arith.constant 0 : i32
    return %c0_i32, %c0_i32_0 : i32, i32
  }
  func.func @transform_3(%arg0: i32) -> (i32, i32) {
    %c0_i32 = arith.constant 0 : i32
    %c0_i32_0 = arith.constant 0 : i32
    %c0_i32_1 = arith.constant 0 : i32
    return %c0_i32, %c0_i32_0 : i32, i32
  }
  func.func @transform_4(%arg0: i32) -> (i32, i32) {
    %c0_i32 = arith.constant 0 : i32
    %c0_i32_0 = arith.constant 0 : i32
    %c0_i32_1 = arith.constant 0 : i32
    return %c0_i32, %c0_i32_0 : i32, i32
  }
  func.func @transform_5(%arg0: i32) -> (i32, i32) {
    %c0_i32 = arith.constant 0 : i32
    %c0_i32_0 = arith.constant 0 : i32
    return %arg0, %c0_i32 : i32, i32
  }
}

module attributes {stable_mosaic.version = 11 : i64} {
  func.func @expert_kernel(%arg0: i32, %arg1: memref<128x32xbf16, #tpu.memory_space<vmem>>, %arg2: memref<32x64xbf16, #tpu.memory_space<vmem>>, %arg3: memref<1x64xf32, #tpu.memory_space<vmem>>, %arg4: memref<64x16xbf16, #tpu.memory_space<vmem>>, %arg5: memref<1x16xf32, #tpu.memory_space<vmem>>, %arg6: memref<128x16xf32, #tpu.memory_space<vmem>>) attributes {dimension_semantics = [#tpu.dimension_semantics<parallel>], iteration_bounds = array<i64: 2>, scalar_prefetch = 0 : i64, scratch_operands = 0 : i64, tpu.core_type = #tpu.core_type<tc>, window_params = [{transform_indices = @transform_0, window_bounds = array<i64: 128, 32>}, {pipeline_mode = #tpu.pipeline_mode<synchronous>, transform_indices = @transform_1, window_bounds = array<i64: 32, 64>}, {pipeline_mode = #tpu.pipeline_mode<synchronous>, transform_indices = @transform_2, window_bounds = array<i64: 1, 64>}, {pipeline_mode = #tpu.pipeline_mode<synchronous>, transform_indices = @transform_3, window_bounds = array<i64: 64, 16>}, {pipeline_mode = #tpu.pipeline_mode<synchronous>, transform_indices = @transform_4, window_bounds = array<i64: 1, 16>}, {transform_indices = @transform_5, window_bounds = array<i64: 128, 16>}]} {
    %c0 = arith.constant 0 : index
    %c0_0 = arith.constant 0 : index
    %0 = vector.load %arg1[%c0, %c0_0] : memref<128x32xbf16, #tpu.memory_space<vmem>>, vector<128x32xbf16>
    %c0_1 = arith.constant 0 : index
    %c0_2 = arith.constant 0 : index
    %1 = vector.load %arg2[%c0_1, %c0_2] : memref<32x64xbf16, #tpu.memory_space<vmem>>, vector<32x64xbf16>
    %cst = arith.constant dense<0.000000e+00> : vector<128x64xf32>
    %2 = tpu.matmul %0, %1, %cst {dimension_numbers = #tpu.dot_dimension_numbers<[1], [0], [0], [1], [0, 0, 1, 1], [], []>} : vector<128x32xbf16>, vector<32x64xbf16>, vector<128x64xf32> -> vector<128x64xf32>
    %c0_3 = arith.constant 0 : index
    %c0_4 = arith.constant 0 : index
    %3 = vector.load %arg3[%c0_3, %c0_4] : memref<1x64xf32, #tpu.memory_space<vmem>>, vector<1x64xf32>
    %4 = vector.broadcast %3 : vector<1x64xf32> to vector<128x64xf32>
    %5 = arith.addf %2, %4 : vector<128x64xf32>
    %cst_5 = arith.constant 0.000000e+00 : f32
    %6 = vector.broadcast %cst_5 : f32 to vector<128x64xf32>
    %7 = arith.maximumf %5, %6 : vector<128x64xf32>
    %8 = arith.truncf %7 : vector<128x64xf32> to vector<128x64xbf16>
    %c0_6 = arith.constant 0 : index
    %c0_7 = arith.constant 0 : index
    %9 = vector.load %arg4[%c0_6, %c0_7] : memref<64x16xbf16, #tpu.memory_space<vmem>>, vector<64x16xbf16>
    %cst_8 = arith.constant dense<0.000000e+00> : vector<128x16xf32>
    %10 = tpu.matmul %8, %9, %cst_8 {dimension_numbers = #tpu.dot_dimension_numbers<[1], [0], [0], [1], [0, 0, 1, 1], [], []>} : vector<128x64xbf16>, vector<64x16xbf16>, vector<128x16xf32> -> vector<128x16xf32>
    %c0_9 = arith.constant 0 : index
    %c0_10 = arith.constant 0 : index
    %11 = vector.load %arg5[%c0_9, %c0_10] : memref<1x16xf32, #tpu.memory_space<vmem>>, vector<1x16xf32>
    %12 = vector.broadcast %11 : vector<1x16xf32> to vector<128x16xf32>
    %13 = arith.addf %10, %12 : vector<128x16xf32>
    %c0_11 = arith.constant 0 : index
    %c0_12 = arith.constant 0 : index
    %14 = vector.load %arg6[%c0_11, %c0_12] : memref<128x16xf32, #tpu.memory_space<vmem>>, vector<128x16xf32>
    tpu.vector_store %arg6[%c0_11, %c0_12], %13 {strides = array<i32>} : memref<128x16xf32, #tpu.memory_space<vmem>>, vector<128x16xf32>,
    return
  }
  func.func @transform_0(%arg0: i32) -> (i32, i32) {
    %c0_i32 = arith.constant 0 : i32
    %c0_i32_0 = arith.constant 0 : i32
    return %arg0, %c0_i32 : i32, i32
  }
  func.func @transform_1(%arg0: i32) -> (i32, i32) {
    %c0_i32 = arith.constant 0 : i32
    %c0_i32_0 = arith.constant 0 : i32
    %c0_i32_1 = arith.constant 0 : i32
    return %c0_i32, %c0_i32_0 : i32, i32
  }
  func.func @transform_2(%arg0: i32) -> (i32, i32) {
    %c0_i32 = arith.constant 0 : i32
    %c0_i32_0 = arith.constant 0 : i32
    %c0_i32_1 = arith.constant 0 : i32
    return %c0_i32, %c0_i32_0 : i32, i32
  }
  func.func @transform_3(%arg0: i32) -> (i32, i32) {
    %c0_i32 = arith.constant 0 : i32
    %c0_i32_0 = arith.constant 0 : i32
    %c0_i32_1 = arith.constant 0 : i32
    return %c0_i32, %c0_i32_0 : i32, i32
  }
  func.func @transform_4(%arg0: i32) -> (i32, i32) {
    %c0_i32 = arith.constant 0 : i32
    %c0_i32_0 = arith.constant 0 : i32
    %c0_i32_1 = arith.constant 0 : i32
    return %c0_i32, %c0_i32_0 : i32, i32
  }
  func.func @transform_5(%arg0: i32) -> (i32, i32) {
    %c0_i32 = arith.constant 0 : i32
    %c0_i32_0 = arith.constant 0 : i32
    return %arg0, %c0_i32 : i32, i32
  }
}

</mosaic_0001>

<llo_original>
// kernel: tpu_custom_call.1
$region0: #{tpu_custom_call.1}
  #allocation0 [shape = 'u32[]', space=smem, size = 0x4, offset = 0x4, fixed_abs, tag = 'smem constant byte address 0x4 - core index']
  #allocation1 [shape = 'u32[144,128]{1,0:T(1,128)}', space=vmem, size = 0x12000, scoped, tag = 'internal scratch']
  %s0 = inlined_call_operand.vmem [shape: bf16[256,32], index: 0, kind: input, shape index: {}]
  %s1 = inlined_call_operand.vmem [shape: bf16[32,64], index: 1, kind: input, shape index: {}]
  %s2 = inlined_call_operand.vmem [shape: f32[1,64], index: 2, kind: input, shape index: {}]
  %s3 = inlined_call_operand.vmem [shape: bf16[64,16], index: 3, kind: input, shape index: {}]
  %s4 = inlined_call_operand.vmem [shape: f32[1,16], index: 4, kind: input, shape index: {}]
  %s5 = inlined_call_operand.vmem [shape: f32[256,16], index: 5, kind: output, shape index: {}]
  %s6 = sld [smem:[#allocation0]]
  $region53: #{tpu_custom_call.1} parent=0
    _
  %s8 = ssub.s32 1, %s6
  %s9 = scalar_select 0, %s8, %s6
  loop: start=0, step=1, limit=4
  $region2: #{tpu_custom_call.1} parent=0 // loop_pre_header
    _
  $region3: #{tpu_custom_call.1} parent=0 // loop_header
    %s11 = sphi 0, %s15
    %p12 = scmp.ge.s32.totalorder %s11, 4
    %s21 = sphi 0, %s23
    %s24 = sphi 0, %s21
    %s25 = sphi 0, %s24
    %s41 = sphi 0, %s25
    %s45 = sphi 0, %s45
    %s47 = sphi 0, %s45
    %s48 = sphi 0, %s47
    %s62 = sphi 0, %s48
    %s66 = sphi 0, %s66
    %s68 = sphi 0, %s66
    %s69 = sphi 0, %s68
    %s83 = sphi 0, %s69
    %s87 = sphi 0, %s87
    %s89 = sphi 0, %s87
    %s90 = sphi 0, %s89
    %s104 = sphi 0, %s90
    %s108 = sphi 0, %s108
    %s110 = sphi 0, %s108
    %s111 = sphi 0, %s110
    %s125 = sphi 0, %s111
    %s131 = sphi 0, %s133
    %s134 = sphi 0, %s131
    %s135 = sphi 0, %s134
    %s151 = sphi 0, %s135
  $region4: #{tpu_custom_call.1} parent=0 // loop_header_branch
    %14 = sbr.rel (%p12) target = $region8
  $region5: #{tpu_custom_call.1} parent=0 // loop_body
    %s16 = ssub.s32 %s11, 1
    %s17 = ssub.s32 %s11, 2
    %s18 = sadd.s32 %s11, 1
    %s19 = ssub.s32 %s11, %s18
    %p20 = scmp.eq.s32.totalorder %s19, 0
    %s22 = sadd.s32 %s21, 1
    %s23 = scalar_select %p20, %s21, %s22
    %p26 = pneg %p20
    %p27 = scmp.eq.s32.totalorder %s11, 1
    %p28 = por %p26, %p27
    %p29 = scmp.ne.s32.totalorder %s21, %s24
    %p30 = scmp.eq.s32.totalorder %s11, 0
    %p31 = por %p29, %p30
    %p32 = scmp.ne.s32.totalorder %s21, %s24
    %p33 = scmp.eq.s32.totalorder %s16, 1
    %p34 = por %p32, %p33
    %p35 = scmp.ne.s32.totalorder %s24, %s25
    %p36 = scmp.eq.s32.totalorder %s16, 0
    %p37 = por %p35, %p36
    %p38 = scmp.ne.s32.totalorder %s24, %s25
    %p39 = scmp.eq.s32.totalorder %s17, 1
    %p40 = por %p38, %p39
    %p42 = scmp.ne.s32.totalorder %s25, %s41
    %p43 = scmp.eq.s32.totalorder %s17, 0
    %p44 = por %p42, %p43
    %s46 = sadd.s32 %s45, 1
    %p49 = scmp.eq.s32.totalorder %s11, 1
    %p50 = scmp.ne.s32.totalorder %s45, %s47
    %p51 = scmp.eq.s32.totalorder %s11, 0
    %p52 = por %p50, %p51
    %p53 = scmp.ne.s32.totalorder %s45, %s47
    %p54 = scmp.eq.s32.totalorder %s16, 1
    %p55 = por %p53, %p54
    %p56 = scmp.ne.s32.totalorder %s47, %s48
    %p57 = scmp.eq.s32.totalorder %s16, 0
    %p58 = por %p56, %p57
    %p59 = scmp.ne.s32.totalorder %s47, %s48
    %p60 = scmp.eq.s32.totalorder %s17, 1
    %p61 = por %p59, %p60
    %p63 = scmp.ne.s32.totalorder %s48, %s62
    %p64 = scmp.eq.s32.totalorder %s17, 0
    %p65 = por %p63, %p64
    %s67 = sadd.s32 %s66, 1
    %p70 = scmp.eq.s32.totalorder %s11, 1
    %p71 = scmp.ne.s32.totalorder %s66, %s68
    %p72 = scmp.eq.s32.totalorder %s11, 0
    %p73 = por %p71, %p72
    %p74 = scmp.ne.s32.totalorder %s66, %s68
    %p75 = scmp.eq.s32.totalorder %s16, 1
    %p76 = por %p74, %p75
    %p77 = scmp.ne.s32.totalorder %s68, %s69
    %p78 = scmp.eq.s32.totalorder %s16, 0
    %p79 = por %p77, %p78
    %p80 = scmp.ne.s32.totalorder %s68, %s69
    %p81 = scmp.eq.s32.totalorder %s17, 1
    %p82 = por %p80, %p81
    %p84 = scmp.ne.s32.totalorder %s69, %s83
    %p85 = scmp.eq.s32.totalorder %s17, 0
    %p86 = por %p84, %p85
    %s88 = sadd.s32 %s87, 1
    %p91 = scmp.eq.s32.totalorder %s11, 1
    %p92 = scmp.ne.s32.totalorder %s87, %s89
    %p93 = scmp.eq.s32.totalorder %s11, 0
    %p94 = por %p92, %p93
    %p95 = scmp.ne.s32.totalorder %s87, %s89
    %p96 = scmp.eq.s32.totalorder %s16, 1
    %p97 = por %p95, %p96
    %p98 = scmp.ne.s32.totalorder %s89, %s90
    %p99 = scmp.eq.s32.totalorder %s16, 0
    %p100 = por %p98, %p99
    %p101 = scmp.ne.s32.totalorder %s89, %s90
    %p102 = scmp.eq.s32.totalorder %s17, 1
    %p103 = por %p101, %p102
    %p105 = scmp.ne.s32.totalorder %s90, %s104
    %p106 = scmp.eq.s32.totalorder %s17, 0
    %p107 = por %p105, %p106
    %s109 = sadd.s32 %s108, 1
    %p112 = scmp.eq.s32.totalorder %s11, 1
    %p113 = scmp.ne.s32.totalorder %s108, %s110
    %p114 = scmp.eq.s32.totalorder %s11, 0
    %p115 = por %p113, %p114
    %p116 = scmp.ne.s32.totalorder %s108, %s110
    %p117 = scmp.eq.s32.totalorder %s16, 1
    %p118 = por %p116, %p117
    %p119 = scmp.ne.s32.totalorder %s110, %s111
    %p120 = scmp.eq.s32.totalorder %s16, 0
    %p121 = por %p119, %p120
    %p122 = scmp.ne.s32.totalorder %s110, %s111
    %p123 = scmp.eq.s32.totalorder %s17, 1
    %p124 = por %p122, %p123
    %p126 = scmp.ne.s32.totalorder %s111, %s125
    %p127 = scmp.eq.s32.totalorder %s17, 0
    %p128 = por %p126, %p127
    %s129 = ssub.s32 %s11, %s18
    %p130 = scmp.eq.s32.totalorder %s129, 0
    %s132 = sadd.s32 %s131, 1
    %s133 = scalar_select %p130, %s131, %s132
    %p136 = pneg %p130
    %p137 = scmp.eq.s32.totalorder %s11, 1
    %p138 = por %p136, %p137
    %p139 = scmp.ne.s32.totalorder %s131, %s134
    %p140 = scmp.eq.s32.totalorder %s11, 0
    %p141 = por %p139, %p140
    %p142 = scmp.ne.s32.totalorder %s131, %s134
    %p143 = scmp.eq.s32.totalorder %s16, 1
    %p144 = por %p142, %p143
    %p145 = scmp.ne.s32.totalorder %s134, %s135
    %p146 = scmp.eq.s32.totalorder %s16, 0
    %p147 = por %p145, %p146
    %p148 = scmp.ne.s32.totalorder %s134, %s135
    %p149 = scmp.eq.s32.totalorder %s17, 1
    %p150 = por %p148, %p149
    %p152 = scmp.ne.s32.totalorder %s135, %s151
    %p153 = scmp.eq.s32.totalorder %s17, 0
    %p154 = por %p152, %p153
    %p155 = scmp.le.s32.totalorder 1, %s11
    %p156 = scmp.lt.s32.totalorder %s11, 3
    %p157 = pnand %p155, %p156
    %p158 = pneg %p157
    // Predicated region
    $region9: #{tpu_custom_call.1} parent=5 // pred_check
      _
    $region10: #{tpu_custom_call.1} parent=5 // pred_check_branch
      %160 = sbr.rel (%p157) target = $region12
    $region11: #{tpu_custom_call.1} parent=5 // pred_region
      %s161 = ssub.s32 %s11, 1
      // Predicated region
      $region13: #{tpu_custom_call.1} parent=11 // pred_check
        %p162 = pneg %p58
      $region14: #{tpu_custom_call.1} parent=11 // pred_check_branch
        %164 = sbr.rel (%p162) target = $region16
      $region15: #{tpu_custom_call.1} parent=11 // pred_region
        _
      $region16: #{tpu_custom_call.1} parent=11 // pred_fallthru
        _
      // Predicated region
      $region17: #{tpu_custom_call.1} parent=11 // pred_check
        %p165 = pneg %p79
      $region18: #{tpu_custom_call.1} parent=11 // pred_check_branch
        %167 = sbr.rel (%p165) target = $region20
      $region19: #{tpu_custom_call.1} parent=11 // pred_region
        _
      $region20: #{tpu_custom_call.1} parent=11 // pred_fallthru
        _
      // Predicated region
      $region21: #{tpu_custom_call.1} parent=11 // pred_check
        %p168 = pneg %p100
      $region22: #{tpu_custom_call.1} parent=11 // pred_check_branch
        %170 = sbr.rel (%p168) target = $region24
      $region23: #{tpu_custom_call.1} parent=11 // pred_region
        _
      $region24: #{tpu_custom_call.1} parent=11 // pred_fallthru
        _
      // Predicated region
      $region25: #{tpu_custom_call.1} parent=11 // pred_check
        %p171 = pneg %p121
      $region26: #{tpu_custom_call.1} parent=11 // pred_check_branch
        %173 = sbr.rel (%p171) target = $region28
      $region27: #{tpu_custom_call.1} parent=11 // pred_region
        _
      $region28: #{tpu_custom_call.1} parent=11 // pred_fallthru
        _
    $region12: #{tpu_custom_call.1} parent=5 // pred_fallthru
      _
    %p174 = scmp.lt.s32.totalorder %s11, 2
    // Predicated region
    $region29: #{tpu_custom_call.1} parent=5 // pred_check
      %p175 = pneg %p174
    $region30: #{tpu_custom_call.1} parent=5 // pred_check_branch
      %177 = sbr.rel (%p175) target = $region32
    $region31: #{tpu_custom_call.1} parent=5 // pred_region
      // Predicated region
      $region33: #{tpu_custom_call.1} parent=31 // pred_check
        %p178 = pneg %p31
      $region34: #{tpu_custom_call.1} parent=31 // pred_check_branch
        %180 = sbr.rel (%p178) target = $region36
      $region35: #{tpu_custom_call.1} parent=31 // pred_region
        %s181 = smul.u32 16, %s11
        %p182 = scmp.lt.s32.totalorder %s181, 31
        %s183 = scalar_select %p182, %s181, 31
        %s184 = smul.addr %s183, 4
        %s185 = scalar_lea.vmem %s0, %s184
        %s186 = smul.u32 16, %s11
      $region36: #{tpu_custom_call.1} parent=31 // pred_fallthru
        _
    $region32: #{tpu_custom_call.1} parent=5 // pred_fallthru
      _
    %p187 = scmp.le.s32.totalorder 1, %s11
    %p188 = scmp.lt.s32.totalorder %s11, 3
    %p189 = pnand %p187, %p188
    %p190 = pneg %p189
    // Predicated region
    $region37: #{tpu_custom_call.1} parent=5 // pred_check
      _
    $region38: #{tpu_custom_call.1} parent=5 // pred_check_branch
      %192 = sbr.rel (%p189) target = $region40
    $region39: #{tpu_custom_call.1} parent=5 // pred_region
      %s193 = ssub.s32 %s11, 1
      %s194 = smul.u32 16, %s16
      %p195 = scmp.lt.s32.totalorder %s194, 31
      %s196 = scalar_select %p195, %s194, 31
      %s197 = smul.addr %s196, 4
      %s198 = scalar_lea.vmem %s0, %s197
      %p199 = pneg %p37
      %p200 = pneg %p34
      %p201 = pneg %p58
      %p202 = pneg %p55
      %p203 = pneg %p79
      %p204 = pneg %p76
      %p205 = pneg %p100
      %p206 = pneg %p97
      %p207 = pneg %p121
      %p208 = pneg %p118
      %p209 = pneg %p147
      %p210 = pneg %p144
      %s211 = smul.u32 16, %s16
      %p212 = scmp.lt.s32.totalorder %s211, 31
      %s213 = scalar_select %p212, %s211, 31
      %s214 = smul.addr %s213, 8
      %s215 = scalar_lea.vmem %s5, %s214
      %s216 = smul.u32 16, %s16
      %p217 = scmp.lt.s32.totalorder %s216, 31
      %s218 = scalar_select %p217, %s216, 31
      %s219 = smul.addr %s218, 4
      %s220 = scalar_lea.vmem %s0, %s219
      %s221 = smul.u32 16, %s16
      %s222 = smul.u32 16, %s16
      %p223 = scmp.lt.s32.totalorder %s222, 31
      %s224 = scalar_select %p223, %s222, 31
      %s225 = smul.addr %s224, 8
      %s226 = scalar_lea.vmem %s5, %s225
      %s227 = smul.u32 16, %s16
      %v229 = vld [vmem:[%s220] sm:$0xf]
      %v230 = vld [vmem:[%s220 + $0x4] sm:$0xf]
      %v231 = vld [vmem:[%s220 + $0x8] sm:$0xf]
      %v232 = vld [vmem:[%s220 + $0xc] sm:$0xf]
      %v233 = vld [vmem:[%s220 + $0x10] sm:$0xf]
      %v234 = vld [vmem:[%s220 + $0x14] sm:$0xf]
      %v235 = vld [vmem:[%s220 + $0x18] sm:$0xf]
      %v236 = vld [vmem:[%s220 + $0x1c] sm:$0xf]
      %v237 = vld [vmem:[%s220 + $0x20] sm:$0xf]
      %v238 = vld [vmem:[%s220 + $0x24] sm:$0xf]
      %v239 = vld [vmem:[%s220 + $0x28] sm:$0xf]
      %v240 = vld [vmem:[%s220 + $0x2c] sm:$0xf]
      %v241 = vld [vmem:[%s220 + $0x30] sm:$0xf]
      %v242 = vld [vmem:[%s220 + $0x34] sm:$0xf]
      %v243 = vld [vmem:[%s220 + $0x38] sm:$0xf]
      %v244 = vld [vmem:[%s220 + $0x3c] sm:$0xf]
      %v245 = vld [vmem:[%s1] sm:$0xf]
      %v246 = vld [vmem:[%s1 + $0x4] sm:$0xf]
      %v247 = vld [vmem:[%s1 + $0x8] sm:$0xf]
      %v248 = vld [vmem:[%s1 + $0xc] sm:$0xf]
      %v249 = vld [vmem:[%s2] sm:$0x1]
      %v251 = vlaneseq
      %v252 = vshrl.u32 %v251, 7
      %v253 = vsub.s32 0, %v252
      %v254 = vrot.slane %v249, %v253
      %v272 = vunpack.c.l.b16 %v229
      %v273 = vunpack.c.l.b16 %v230
      %v274 = vunpack.c.l.b16 %v231
      %v275 = vunpack.c.l.b16 %v232
      %v276 = vunpack.c.l.b16 %v233
      %v277 = vunpack.c.l.b16 %v234
      %v278 = vunpack.c.l.b16 %v235
      %v279 = vunpack.c.l.b16 %v236
      %v280 = vunpack.c.l.b16 %v237
      %v281 = vunpack.c.l.b16 %v238
      %v282 = vunpack.c.l.b16 %v239
      %v283 = vunpack.c.l.b16 %v240
      %v284 = vunpack.c.l.b16 %v241
      %v285 = vunpack.c.l.b16 %v242
      %v286 = vunpack.c.l.b16 %v243
      %v287 = vunpack.c.l.b16 %v244
      %v288 = vpack.c.b16 %v273, %v272
      %v289 = vpack.c.b16 %v275, %v274
      %v290 = vpack.c.b16 %v277, %v276
      %v291 = vpack.c.b16 %v279, %v278
      %v292 = vpack.c.b16 %v281, %v280
      %v293 = vpack.c.b16 %v283, %v282
      %v294 = vpack.c.b16 %v285, %v284
      %v295 = vpack.c.b16 %v287, %v286
      %v300 = vunpack.c.l.b16 %v245
      %v301 = vunpack.c.l.b16 %v246
      %v302 = vunpack.c.l.b16 %v247
      %v303 = vunpack.c.l.b16 %v248
      %v304 = vpack.c.b16 %v301, %v300
      %v305 = vpack.c.b16 %v303, %v302
      %vm308 = vcmask 261120
      %v310 = vsel %vm308, %v288, 0
      %v313 = vsel %vm308, %v289, 0
      %v316 = vsel %vm308, %v290, 0
      %v319 = vsel %vm308, %v291, 0
      %v322 = vsel %vm308, %v292, 0
      %v325 = vsel %vm308, %v293, 0
      %v328 = vsel %vm308, %v294, 0
      %v331 = vsel %vm308, %v295, 0
      %333 = vmatprep.subr.bf16.mxu0 0
      %334 = vmatpush1.bf16.msra.mxu0 %v304
      %335 = vmatprep.subr.bf16.mxu0 0
      %336 = vmatpush1.bf16.msra.mxu0 %v305
      %337 = vmatprep.subr.bf16.mxu0 0
      %338 = vmatpush1.bf16.msra.mxu0 0
      %339 = vmatprep.subr.bf16.mxu0 0
      %340 = vmatpush1.bf16.msra.mxu0 0
      %341 = vmatprep.subr.bf16.mxu0 0
      %342 = vmatpush1.bf16.msra.mxu0 0
      %343 = vmatprep.subr.bf16.mxu0 0
      %344 = vmatpush1.bf16.msra.mxu0 0
      %345 = vmatprep.subr.bf16.mxu0 0
      %346 = vmatpush1.bf16.msra.mxu0 0
      %347 = vmatprep.subr.bf16.mxu0 0
      %348 = vmatpush1.bf16.msra.mxu0 0
      %349 = vmatprep.subr.bf16.mxu0 0
      %350 = vmatpush1.bf16.msra.mxu0 0
      %351 = vmatprep.subr.bf16.mxu0 0
      %352 = vmatpush1.bf16.msra.mxu0 0
      %353 = vmatprep.subr.bf16.mxu0 0
      %354 = vmatpush1.bf16.msra.mxu0 0
      %355 = vmatprep.subr.bf16.mxu0 0
      %356 = vmatpush1.bf16.msra.mxu0 0
      %357 = vmatprep.subr.bf16.mxu0 0
      %358 = vmatpush1.bf16.msra.mxu0 0
      %359 = vmatprep.subr.bf16.mxu0 0
      %360 = vmatpush1.bf16.msra.mxu0 0
      %361 = vmatprep.subr.bf16.mxu0 0
      %362 = vmatpush1.bf16.msra.mxu0 0
      %363 = vmatprep.subr.bf16.mxu0 0
      %364 = vmatpush1.bf16.msra.mxu0 0
      %365 = vmatprep.mubr.bf16.mxu0 0
      %366 = vmatmul.mubr.bf16.gmra.mrb[0].mxu0 %v310
      %v367 = vpop.f32.mrb[0].mxu0
      %v368 = vadd.f32 %v254, %v367
      %v369 = vpop.f32.mrb[0].mxu0
      %v370 = vpop.f32.mrb[0].mxu0
      %v371 = vadd.f32 %v254, %v370
      %v372 = vpop.f32.mrb[0].mxu0
      %373 = vmatprep.mubr.bf16.mxu0 0
      %374 = vmatmul.mubr.bf16.gmra.mrb[0].mxu0 %v313
      %v375 = vpop.f32.mrb[0].mxu0
      %v376 = vadd.f32 %v254, %v375
      %v377 = vpop.f32.mrb[0].mxu0
      %v378 = vpop.f32.mrb[0].mxu0
      %v379 = vadd.f32 %v254, %v378
      %v380 = vpop.f32.mrb[0].mxu0
      %381 = vmatprep.mubr.bf16.mxu0 0
      %382 = vmatmul.mubr.bf16.gmra.mrb[0].mxu0 %v316
      %v383 = vpop.f32.mrb[0].mxu0
      %v384 = vadd.f32 %v254, %v383
      %v385 = vpop.f32.mrb[0].mxu0
      %v386 = vpop.f32.mrb[0].mxu0
      %v387 = vadd.f32 %v254, %v386
      %v388 = vpop.f32.mrb[0].mxu0
      %389 = vmatprep.mubr.bf16.mxu0 0
      %390 = vmatmul.mubr.bf16.gmra.mrb[0].mxu0 %v319
      %v391 = vpop.f32.mrb[0].mxu0
      %v392 = vadd.f32 %v254, %v391
      %v393 = vpop.f32.mrb[0].mxu0
      %v394 = vpop.f32.mrb[0].mxu0
      %v395 = vadd.f32 %v254, %v394
      %v396 = vpop.f32.mrb[0].mxu0
      %397 = vmatprep.mubr.bf16.mxu0 0
      %398 = vmatmul.mubr.bf16.gmra.mrb[0].mxu0 %v322
      %v399 = vpop.f32.mrb[0].mxu0
      %v400 = vadd.f32 %v254, %v399
      %v401 = vpop.f32.mrb[0].mxu0
      %v402 = vpop.f32.mrb[0].mxu0
      %v403 = vadd.f32 %v254, %v402
      %v404 = vpop.f32.mrb[0].mxu0
      %405 = vmatprep.mubr.bf16.mxu0 0
      %406 = vmatmul.mubr.bf16.gmra.mrb[0].mxu0 %v325
      %v407 = vpop.f32.mrb[0].mxu0
      %v408 = vadd.f32 %v254, %v407
      %v409 = vpop.f32.mrb[0].mxu0
      %v410 = vpop.f32.mrb[0].mxu0
      %v411 = vadd.f32 %v254, %v410
      %v412 = vpop.f32.mrb[0].mxu0
      %413 = vmatprep.mubr.bf16.mxu0 0
      %414 = vmatmul.mubr.bf16.gmra.mrb[0].mxu0 %v328
      %v415 = vpop.f32.mrb[0].mxu0
      %v416 = vadd.f32 %v254, %v415
      %v417 = vpop.f32.mrb[0].mxu0
      %v418 = vpop.f32.mrb[0].mxu0
      %v419 = vadd.f32 %v254, %v418
      %v420 = vpop.f32.mrb[0].mxu0
      %421 = vmatprep.mubr.bf16.mxu0 0
      %422 = vmatmul.mubr.bf16.gmra.mrb[0].mxu0 %v331
      %v423 = vpop.f32.mrb[0].mxu0
      %v424 = vadd.f32 %v254, %v423
      %v425 = vpop.f32.mrb[0].mxu0
      %v426 = vpop.f32.mrb[0].mxu0
      %v427 = vadd.f32 %v254, %v426
      %v428 = vpop.f32.mrb[0].mxu0
      %429 = vdwg.mxu0
      %v430 = vmax.f32 %v368, 0.0
      %v431 = vmax.f32 %v371, 0.0
      %v432 = vmax.f32 %v376, 0.0
      %v433 = vmax.f32 %v379, 0.0
      %v434 = vmax.f32 %v384, 0.0
      %v435 = vmax.f32 %v387, 0.0
      %v436 = vmax.f32 %v392, 0.0
      %v437 = vmax.f32 %v395, 0.0
      %v438 = vmax.f32 %v400, 0.0
      %v439 = vmax.f32 %v403, 0.0
      %v440 = vmax.f32 %v408, 0.0
      %v441 = vmax.f32 %v411, 0.0
      %v442 = vmax.f32 %v416, 0.0
      %v443 = vmax.f32 %v419, 0.0
      %v444 = vmax.f32 %v424, 0.0
      %v445 = vmax.f32 %v427, 0.0
      %v446 = vpack.c.bf16 %v431, %v430
      %v447 = vpack.c.bf16 %v433, %v432
      %v448 = vpack.c.bf16 %v435, %v434
      %v449 = vpack.c.bf16 %v437, %v436
      %v450 = vpack.c.bf16 %v439, %v438
      %v451 = vpack.c.bf16 %v441, %v440
      %v452 = vpack.c.bf16 %v443, %v442
      %v453 = vpack.c.bf16 %v445, %v444
      %v454 = vld [vmem:[%s3] sm:$0xf]
      %v455 = vld [vmem:[%s3 + $0x4] sm:$0xf]
      %v456 = vld [vmem:[%s3 + $0x8] sm:$0xf]
      %v457 = vld [vmem:[%s3 + $0xc] sm:$0xf]
      %v458 = vld [vmem:[%s3 + $0x10] sm:$0xf]
      %v459 = vld [vmem:[%s3 + $0x14] sm:$0xf]
      %v460 = vld [vmem:[%s3 + $0x18] sm:$0xf]
      %v461 = vld [vmem:[%s3 + $0x1c] sm:$0xf]
      %v462 = vld [vmem:[%s4] sm:$0x1]
      %v464 = vlaneseq
      %v465 = vshrl.u32 %v464, 7
      %v466 = vsub.s32 0, %v465
      %v467 = vrot.slane %v462, %v466
      %v477 = vunpack.c.l.b16 %v454
      %v478 = vunpack.c.l.b16 %v455
      %v479 = vunpack.c.l.b16 %v456
      %v480 = vunpack.c.l.b16 %v457
      %v481 = vunpack.c.l.b16 %v458
      %v482 = vunpack.c.l.b16 %v459
      %v483 = vunpack.c.l.b16 %v460
      %v484 = vunpack.c.l.b16 %v461
      %v485 = vpack.c.b16 %v478, %v477
      %v486 = vpack.c.b16 %v480, %v479
      %v487 = vpack.c.b16 %v482, %v481
      %v488 = vpack.c.b16 %v484, %v483
      %vm493 = vcmask 523264
      %v495 = vsel %vm493, %v446, 0
      %v498 = vsel %vm493, %v447, 0
      %v501 = vsel %vm493, %v448, 0
      %v504 = vsel %vm493, %v449, 0
      %v507 = vsel %vm493, %v450, 0
      %v510 = vsel %vm493, %v451, 0
      %v513 = vsel %vm493, %v452, 0
      %v516 = vsel %vm493, %v453, 0
      %518 = vmatprep.subr.bf16.mxu0 0
      %519 = vmatpush1.bf16.msra.mxu0 %v485
      %520 = vmatprep.subr.bf16.mxu0 0
      %521 = vmatpush1.bf16.msra.mxu0 %v486
      %522 = vmatprep.subr.bf16.mxu0 0
      %523 = vmatpush1.bf16.msra.mxu0 %v487
      %524 = vmatprep.subr.bf16.mxu0 0
      %525 = vmatpush1.bf16.msra.mxu0 %v488
      %526 = vmatprep.subr.bf16.mxu0 0
      %527 = vmatpush1.bf16.msra.mxu0 0
      %528 = vmatprep.subr.bf16.mxu0 0
      %529 = vmatpush1.bf16.msra.mxu0 0
      %530 = vmatprep.subr.bf16.mxu0 0
      %531 = vmatpush1.bf16.msra.mxu0 0
      %532 = vmatprep.subr.bf16.mxu0 0
      %533 = vmatpush1.bf16.msra.mxu0 0
      %534 = vmatprep.subr.bf16.mxu0 0
      %535 = vmatpush1.bf16.msra.mxu0 0
      %536 = vmatprep.subr.bf16.mxu0 0
      %537 = vmatpush1.bf16.msra.mxu0 0
      %538 = vmatprep.subr.bf16.mxu0 0
      %539 = vmatpush1.bf16.msra.mxu0 0
      %540 = vmatprep.subr.bf16.mxu0 0
      %541 = vmatpush1.bf16.msra.mxu0 0
      %542 = vmatprep.subr.bf16.mxu0 0
      %543 = vmatpush1.bf16.msra.mxu0 0
      %544 = vmatprep.subr.bf16.mxu0 0
      %545 = vmatpush1.bf16.msra.mxu0 0
      %546 = vmatprep.subr.bf16.mxu0 0
      %547 = vmatpush1.bf16.msra.mxu0 0
      %548 = vmatprep.subr.bf16.mxu0 0
      %549 = vmatpush1.bf16.msra.mxu0 0
      %550 = vmatprep.mubr.bf16.mxu0 0
      %551 = vmatmul.mubr.bf16.gmra.mrb[0].mxu0 %v495
      %v552 = vpop.f32.mrb[0].mxu0
      %v553 = vadd.f32 %v467, %v552
      %v554 = vpop.f32.mrb[0].mxu0
      %v555 = vpop.f32.mrb[0].mxu0
      %v556 = vadd.f32 %v467, %v555
      %v557 = vpop.f32.mrb[0].mxu0
      %558 = vmatprep.mubr.bf16.mxu0 0
      %559 = vmatmul.mubr.bf16.gmra.mrb[0].mxu0 %v498
      %v560 = vpop.f32.mrb[0].mxu0
      %v561 = vadd.f32 %v467, %v560
      %v562 = vpop.f32.mrb[0].mxu0
      %v563 = vpop.f32.mrb[0].mxu0
      %v564 = vadd.f32 %v467, %v563
      %v565 = vpop.f32.mrb[0].mxu0
      %566 = vmatprep.mubr.bf16.mxu0 0
      %567 = vmatmul.mubr.bf16.gmra.mrb[0].mxu0 %v501
      %v568 = vpop.f32.mrb[0].mxu0
      %v569 = vadd.f32 %v467, %v568
      %v570 = vpop.f32.mrb[0].mxu0
      %v571 = vpop.f32.mrb[0].mxu0
      %v572 = vadd.f32 %v467, %v571
      %v573 = vpop.f32.mrb[0].mxu0
      %574 = vmatprep.mubr.bf16.mxu0 0
      %575 = vmatmul.mubr.bf16.gmra.mrb[0].mxu0 %v504
      %v576 = vpop.f32.mrb[0].mxu0
      %v577 = vadd.f32 %v467, %v576
      %v578 = vpop.f32.mrb[0].mxu0
      %v579 = vpop.f32.mrb[0].mxu0
      %v580 = vadd.f32 %v467, %v579
      %v581 = vpop.f32.mrb[0].mxu0
      %582 = vmatprep.mubr.bf16.mxu0 0
      %583 = vmatmul.mubr.bf16.gmra.mrb[0].mxu0 %v507
      %v584 = vpop.f32.mrb[0].mxu0
      %v585 = vadd.f32 %v467, %v584
      %v586 = vpop.f32.mrb[0].mxu0
      %v587 = vpop.f32.mrb[0].mxu0
      %v588 = vadd.f32 %v467, %v587
      %v589 = vpop.f32.mrb[0].mxu0
      %590 = vmatprep.mubr.bf16.mxu0 0
      %591 = vmatmul.mubr.bf16.gmra.mrb[0].mxu0 %v510
      %v592 = vpop.f32.mrb[0].mxu0
      %v593 = vadd.f32 %v467, %v592
      %v594 = vpop.f32.mrb[0].mxu0
      %v595 = vpop.f32.mrb[0].mxu0
      %v596 = vadd.f32 %v467, %v595
      %v597 = vpop.f32.mrb[0].mxu0
      %598 = vmatprep.mubr.bf16.mxu0 0
      %599 = vmatmul.mubr.bf16.gmra.mrb[0].mxu0 %v513
      %v600 = vpop.f32.mrb[0].mxu0
      %v601 = vadd.f32 %v467, %v600
      %v602 = vpop.f32.mrb[0].mxu0
      %v603 = vpop.f32.mrb[0].mxu0
      %v604 = vadd.f32 %v467, %v603
      %v605 = vpop.f32.mrb[0].mxu0
      %606 = vmatprep.mubr.bf16.mxu0 0
      %607 = vmatmul.mubr.bf16.gmra.mrb[0].mxu0 %v516
      %v608 = vpop.f32.mrb[0].mxu0
      %v609 = vadd.f32 %v467, %v608
      %v610 = vpop.f32.mrb[0].mxu0
      %v611 = vpop.f32.mrb[0].mxu0
      %v612 = vadd.f32 %v467, %v611
      %v613 = vpop.f32.mrb[0].mxu0
      %614 = vdwg.mxu0
      %vm615 = vcmask 130048
      %616 = vst.msk [vmem:[%s226] sm:$0xff] %vm615, %v553
      %617 = vst.msk [vmem:[%s226 + $0x8] sm:$0xff] %vm615, %v556
      %618 = vst.msk [vmem:[%s226 + $0x10] sm:$0xff] %vm615, %v561
      %619 = vst.msk [vmem:[%s226 + $0x18] sm:$0xff] %vm615, %v564
      %620 = vst.msk [vmem:[%s226 + $0x20] sm:$0xff] %vm615, %v569
      %621 = vst.msk [vmem:[%s226 + $0x28] sm:$0xff] %vm615, %v572
      %622 = vst.msk [vmem:[%s226 + $0x30] sm:$0xff] %vm615, %v577
      %623 = vst.msk [vmem:[%s226 + $0x38] sm:$0xff] %vm615, %v580
      %624 = vst.msk [vmem:[%s226 + $0x40] sm:$0xff] %vm615, %v585
      %625 = vst.msk [vmem:[%s226 + $0x48] sm:$0xff] %vm615, %v588
      %626 = vst.msk [vmem:[%s226 + $0x50] sm:$0xff] %vm615, %v593
      %627 = vst.msk [vmem:[%s226 + $0x58] sm:$0xff] %vm615, %v596
      %628 = vst.msk [vmem:[%s226 + $0x60] sm:$0xff] %vm615, %v601
      %629 = vst.msk [vmem:[%s226 + $0x68] sm:$0xff] %vm615, %v604
      %630 = vst.msk [vmem:[%s226 + $0x70] sm:$0xff] %vm615, %v609
      %631 = vst.msk [vmem:[%s226 + $0x78] sm:$0xff] %vm615, %v612
      %s632 = smul.u32 16, %s16
      %p633 = scmp.lt.s32.totalorder %s632, 31
      %s634 = scalar_select %p633, %s632, 31
      %s635 = smul.addr %s634, 8
      %s636 = scalar_lea.vmem %s5, %s635
      // Predicated region
      $region41: #{tpu_custom_call.1} parent=39 // pred_check
        %p637 = pneg %p144
      $region42: #{tpu_custom_call.1} parent=39 // pred_check_branch
        %639 = sbr.rel (%p637) target = $region44
      $region43: #{tpu_custom_call.1} parent=39 // pred_region
        %s640 = smul.u32 16, %s16
      $region44: #{tpu_custom_call.1} parent=39 // pred_fallthru
        _
    $region40: #{tpu_custom_call.1} parent=5 // pred_fallthru
      _
    %p641 = scmp.le.s32.totalorder 2, %s11
    // Predicated region
    $region45: #{tpu_custom_call.1} parent=5 // pred_check
      %p642 = pneg %p641
    $region46: #{tpu_custom_call.1} parent=5 // pred_check_branch
      %644 = sbr.rel (%p642) target = $region48
    $region47: #{tpu_custom_call.1} parent=5 // pred_region
      %s645 = ssub.s32 %s11, 2
      // Predicated region
      $region49: #{tpu_custom_call.1} parent=47 // pred_check
        %p646 = pneg %p150
      $region50: #{tpu_custom_call.1} parent=47 // pred_check_branch
        %648 = sbr.rel (%p646) target = $region52
      $region51: #{tpu_custom_call.1} parent=47 // pred_region
        %s649 = smul.u32 16, %s17
        %p650 = scmp.lt.s32.totalorder %s649, 31
        %s651 = scalar_select %p650, %s649, 31
        %s652 = smul.addr %s651, 8
        %s653 = scalar_lea.vmem %s5, %s652
      $region52: #{tpu_custom_call.1} parent=47 // pred_fallthru
        _
    $region48: #{tpu_custom_call.1} parent=5 // pred_fallthru
      _
  $region6: #{tpu_custom_call.1} parent=0 // loop_footer
    %s15 = sadd.s32 1, %s11
  $region7: #{tpu_custom_call.1} parent=0 // loop_footer_branch
    %10 = sbr.rel target = $region3
  $region8: #{tpu_custom_call.1} parent=0 // loop_exit
    _

// kernel: tpu_custom_call.1
$region0: #{tpu_custom_call.1}
  #allocation0 [shape = 'u32[]', space=smem, size = 0x4, offset = 0x4, fixed_abs, tag = 'smem constant byte address 0x4 - core index']
  #allocation1 [shape = 'u32[144,128]{1,0:T(1,128)}', space=vmem, size = 0x12000, scoped, tag = 'internal scratch']
  %s0 = inlined_call_operand.vmem [shape: bf16[256,32], index: 0, kind: input, shape index: {}]
  %s1 = inlined_call_operand.vmem [shape: bf16[32,64], index: 1, kind: input, shape index: {}]
  %s2 = inlined_call_operand.vmem [shape: f32[1,64], index: 2, kind: input, shape index: {}]
  %s3 = inlined_call_operand.vmem [shape: bf16[64,16], index: 3, kind: input, shape index: {}]
  %s4 = inlined_call_operand.vmem [shape: f32[1,16], index: 4, kind: input, shape index: {}]
  %s5 = inlined_call_operand.vmem [shape: f32[256,16], index: 5, kind: output, shape index: {}]
  %s6 = sld [smem:[#allocation0]]
  $region53: #{tpu_custom_call.1} parent=0
    _
  %s8 = ssub.s32 1, %s6
  %s9 = scalar_select 0, %s8, %s6
  loop: start=0, step=1, limit=4
  $region2: #{tpu_custom_call.1} parent=0 // loop_pre_header
    _
  $region3: #{tpu_custom_call.1} parent=0 // loop_header
    %s11 = sphi 0, %s15
    %p12 = scmp.ge.s32.totalorder %s11, 4
    %s21 = sphi 0, %s23
    %s24 = sphi 0, %s21
    %s25 = sphi 0, %s24
    %s41 = sphi 0, %s25
    %s45 = sphi 0, %s45
    %s47 = sphi 0, %s45
    %s48 = sphi 0, %s47
    %s62 = sphi 0, %s48
    %s66 = sphi 0, %s66
    %s68 = sphi 0, %s66
    %s69 = sphi 0, %s68
    %s83 = sphi 0, %s69
    %s87 = sphi 0, %s87
    %s89 = sphi 0, %s87
    %s90 = sphi 0, %s89
    %s104 = sphi 0, %s90
    %s108 = sphi 0, %s108
    %s110 = sphi 0, %s108
    %s111 = sphi 0, %s110
    %s125 = sphi 0, %s111
    %s131 = sphi 0, %s133
    %s134 = sphi 0, %s131
    %s135 = sphi 0, %s134
    %s151 = sphi 0, %s135
  $region4: #{tpu_custom_call.1} parent=0 // loop_header_branch
    %14 = sbr.rel (%p12) target = $region8
  $region5: #{tpu_custom_call.1} parent=0 // loop_body
    %s16 = ssub.s32 %s11, 1
    %s17 = ssub.s32 %s11, 2
    %s18 = sadd.s32 %s11, 1
    %s19 = ssub.s32 %s11, %s18
    %p20 = scmp.eq.s32.totalorder %s19, 0
    %s22 = sadd.s32 %s21, 1
    %s23 = scalar_select %p20, %s21, %s22
    %p26 = pneg %p20
    %p27 = scmp.eq.s32.totalorder %s11, 1
    %p28 = por %p26, %p27
    %p29 = scmp.ne.s32.totalorder %s21, %s24
    %p30 = scmp.eq.s32.totalorder %s11, 0
    %p31 = por %p29, %p30
    %p32 = scmp.ne.s32.totalorder %s21, %s24
    %p33 = scmp.eq.s32.totalorder %s16, 1
    %p34 = por %p32, %p33
    %p35 = scmp.ne.s32.totalorder %s24, %s25
    %p36 = scmp.eq.s32.totalorder %s16, 0
    %p37 = por %p35, %p36
    %p38 = scmp.ne.s32.totalorder %s24, %s25
    %p39 = scmp.eq.s32.totalorder %s17, 1
    %p40 = por %p38, %p39
    %p42 = scmp.ne.s32.totalorder %s25, %s41
    %p43 = scmp.eq.s32.totalorder %s17, 0
    %p44 = por %p42, %p43
    %s46 = sadd.s32 %s45, 1
    %p49 = scmp.eq.s32.totalorder %s11, 1
    %p50 = scmp.ne.s32.totalorder %s45, %s47
    %p51 = scmp.eq.s32.totalorder %s11, 0
    %p52 = por %p50, %p51
    %p53 = scmp.ne.s32.totalorder %s45, %s47
    %p54 = scmp.eq.s32.totalorder %s16, 1
    %p55 = por %p53, %p54
    %p56 = scmp.ne.s32.totalorder %s47, %s48
    %p57 = scmp.eq.s32.totalorder %s16, 0
    %p58 = por %p56, %p57
    %p59 = scmp.ne.s32.totalorder %s47, %s48
    %p60 = scmp.eq.s32.totalorder %s17, 1
    %p61 = por %p59, %p60
    %p63 = scmp.ne.s32.totalorder %s48, %s62
    %p64 = scmp.eq.s32.totalorder %s17, 0
    %p65 = por %p63, %p64
    %s67 = sadd.s32 %s66, 1
    %p70 = scmp.eq.s32.totalorder %s11, 1
    %p71 = scmp.ne.s32.totalorder %s66, %s68
    %p72 = scmp.eq.s32.totalorder %s11, 0
    %p73 = por %p71, %p72
    %p74 = scmp.ne.s32.totalorder %s66, %s68
    %p75 = scmp.eq.s32.totalorder %s16, 1
    %p76 = por %p74, %p75
    %p77 = scmp.ne.s32.totalorder %s68, %s69
    %p78 = scmp.eq.s32.totalorder %s16, 0
    %p79 = por %p77, %p78
    %p80 = scmp.ne.s32.totalorder %s68, %s69
    %p81 = scmp.eq.s32.totalorder %s17, 1
    %p82 = por %p80, %p81
    %p84 = scmp.ne.s32.totalorder %s69, %s83
    %p85 = scmp.eq.s32.totalorder %s17, 0
    %p86 = por %p84, %p85
    %s88 = sadd.s32 %s87, 1
    %p91 = scmp.eq.s32.totalorder %s11, 1
    %p92 = scmp.ne.s32.totalorder %s87, %s89
    %p93 = scmp.eq.s32.totalorder %s11, 0
    %p94 = por %p92, %p93
    %p95 = scmp.ne.s32.totalorder %s87, %s89
    %p96 = scmp.eq.s32.totalorder %s16, 1
    %p97 = por %p95, %p96
    %p98 = scmp.ne.s32.totalorder %s89, %s90
    %p99 = scmp.eq.s32.totalorder %s16, 0
    %p100 = por %p98, %p99
    %p101 = scmp.ne.s32.totalorder %s89, %s90
    %p102 = scmp.eq.s32.totalorder %s17, 1
    %p103 = por %p101, %p102
    %p105 = scmp.ne.s32.totalorder %s90, %s104
    %p106 = scmp.eq.s32.totalorder %s17, 0
    %p107 = por %p105, %p106
    %s109 = sadd.s32 %s108, 1
    %p112 = scmp.eq.s32.totalorder %s11, 1
    %p113 = scmp.ne.s32.totalorder %s108, %s110
    %p114 = scmp.eq.s32.totalorder %s11, 0
    %p115 = por %p113, %p114
    %p116 = scmp.ne.s32.totalorder %s108, %s110
    %p117 = scmp.eq.s32.totalorder %s16, 1
    %p118 = por %p116, %p117
    %p119 = scmp.ne.s32.totalorder %s110, %s111
    %p120 = scmp.eq.s32.totalorder %s16, 0
    %p121 = por %p119, %p120
    %p122 = scmp.ne.s32.totalorder %s110, %s111
    %p123 = scmp.eq.s32.totalorder %s17, 1
    %p124 = por %p122, %p123
    %p126 = scmp.ne.s32.totalorder %s111, %s125
    %p127 = scmp.eq.s32.totalorder %s17, 0
    %p128 = por %p126, %p127
    %s129 = ssub.s32 %s11, %s18
    %p130 = scmp.eq.s32.totalorder %s129, 0
    %s132 = sadd.s32 %s131, 1
    %s133 = scalar_select %p130, %s131, %s132
    %p136 = pneg %p130
    %p137 = scmp.eq.s32.totalorder %s11, 1
    %p138 = por %p136, %p137
    %p139 = scmp.ne.s32.totalorder %s131, %s134
    %p140 = scmp.eq.s32.totalorder %s11, 0
    %p141 = por %p139, %p140
    %p142 = scmp.ne.s32.totalorder %s131, %s134
    %p143 = scmp.eq.s32.totalorder %s16, 1
    %p144 = por %p142, %p143
    %p145 = scmp.ne.s32.totalorder %s134, %s135
    %p146 = scmp.eq.s32.totalorder %s16, 0
    %p147 = por %p145, %p146
    %p148 = scmp.ne.s32.totalorder %s134, %s135
    %p149 = scmp.eq.s32.totalorder %s17, 1
    %p150 = por %p148, %p149
    %p152 = scmp.ne.s32.totalorder %s135, %s151
    %p153 = scmp.eq.s32.totalorder %s17, 0
    %p154 = por %p152, %p153
    %p155 = scmp.le.s32.totalorder 1, %s11
    %p156 = scmp.lt.s32.totalorder %s11, 3
    %p157 = pnand %p155, %p156
    %p158 = pneg %p157
    // Predicated region
    $region9: #{tpu_custom_call.1} parent=5 // pred_check
      _
    $region10: #{tpu_custom_call.1} parent=5 // pred_check_branch
      %160 = sbr.rel (%p157) target = $region12
    $region11: #{tpu_custom_call.1} parent=5 // pred_region
      %s161 = ssub.s32 %s11, 1
      // Predicated region
      $region13: #{tpu_custom_call.1} parent=11 // pred_check
        %p162 = pneg %p58
      $region14: #{tpu_custom_call.1} parent=11 // pred_check_branch
        %164 = sbr.rel (%p162) target = $region16
      $region15: #{tpu_custom_call.1} parent=11 // pred_region
        _
      $region16: #{tpu_custom_call.1} parent=11 // pred_fallthru
        _
      // Predicated region
      $region17: #{tpu_custom_call.1} parent=11 // pred_check
        %p165 = pneg %p79
      $region18: #{tpu_custom_call.1} parent=11 // pred_check_branch
        %167 = sbr.rel (%p165) target = $region20
      $region19: #{tpu_custom_call.1} parent=11 // pred_region
        _
      $region20: #{tpu_custom_call.1} parent=11 // pred_fallthru
        _
      // Predicated region
      $region21: #{tpu_custom_call.1} parent=11 // pred_check
        %p168 = pneg %p100
      $region22: #{tpu_custom_call.1} parent=11 // pred_check_branch
        %170 = sbr.rel (%p168) target = $region24
      $region23: #{tpu_custom_call.1} parent=11 // pred_region
        _
      $region24: #{tpu_custom_call.1} parent=11 // pred_fallthru
        _
      // Predicated region
      $region25: #{tpu_custom_call.1} parent=11 // pred_check
        %p171 = pneg %p121
      $region26: #{tpu_custom_call.1} parent=11 // pred_check_branch
        %173 = sbr.rel (%p171) target = $region28
      $region27: #{tpu_custom_call.1} parent=11 // pred_region
        _
      $region28: #{tpu_custom_call.1} parent=11 // pred_fallthru
        _
    $region12: #{tpu_custom_call.1} parent=5 // pred_fallthru
      _
    %p174 = scmp.lt.s32.totalorder %s11, 2
    // Predicated region
    $region29: #{tpu_custom_call.1} parent=5 // pred_check
      %p175 = pneg %p174
    $region30: #{tpu_custom_call.1} parent=5 // pred_check_branch
      %177 = sbr.rel (%p175) target = $region32
    $region31: #{tpu_custom_call.1} parent=5 // pred_region
      // Predicated region
      $region33: #{tpu_custom_call.1} parent=31 // pred_check
        %p178 = pneg %p31
      $region34: #{tpu_custom_call.1} parent=31 // pred_check_branch
        %180 = sbr.rel (%p178) target = $region36
      $region35: #{tpu_custom_call.1} parent=31 // pred_region
        %s181 = smul.u32 16, %s11
        %p182 = scmp.lt.s32.totalorder %s181, 31
        %s183 = scalar_select %p182, %s181, 31
        %s184 = smul.addr %s183, 4
        %s185 = scalar_lea.vmem %s0, %s184
        %s186 = smul.u32 16, %s11
      $region36: #{tpu_custom_call.1} parent=31 // pred_fallthru
        _
    $region32: #{tpu_custom_call.1} parent=5 // pred_fallthru
      _
    %p187 = scmp.le.s32.totalorder 1, %s11
    %p188 = scmp.lt.s32.totalorder %s11, 3
    %p189 = pnand %p187, %p188
    %p190 = pneg %p189
    // Predicated region
    $region37: #{tpu_custom_call.1} parent=5 // pred_check
      _
    $region38: #{tpu_custom_call.1} parent=5 // pred_check_branch
      %192 = sbr.rel (%p189) target = $region40
    $region39: #{tpu_custom_call.1} parent=5 // pred_region
      %s193 = ssub.s32 %s11, 1
      %s194 = smul.u32 16, %s16
      %p195 = scmp.lt.s32.totalorder %s194, 31
      %s196 = scalar_select %p195, %s194, 31
      %s197 = smul.addr %s196, 4
      %s198 = scalar_lea.vmem %s0, %s197
      %p199 = pneg %p37
      %p200 = pneg %p34
      %p201 = pneg %p58
      %p202 = pneg %p55
      %p203 = pneg %p79
      %p204 = pneg %p76
      %p205 = pneg %p100
      %p206 = pneg %p97
      %p207 = pneg %p121
      %p208 = pneg %p118
      %p209 = pneg %p147
      %p210 = pneg %p144
      %s211 = smul.u32 16, %s16
      %p212 = scmp.lt.s32.totalorder %s211, 31
      %s213 = scalar_select %p212, %s211, 31
      %s214 = smul.addr %s213, 8
      %s215 = scalar_lea.vmem %s5, %s214
      %s216 = smul.u32 16, %s16
      %p217 = scmp.lt.s32.totalorder %s216, 31
      %s218 = scalar_select %p217, %s216, 31
      %s219 = smul.addr %s218, 4
      %s220 = scalar_lea.vmem %s0, %s219
      %s221 = smul.u32 16, %s16
      %s222 = smul.u32 16, %s16
      %p223 = scmp.lt.s32.totalorder %s222, 31
      %s224 = scalar_select %p223, %s222, 31
      %s225 = smul.addr %s224, 8
      %s226 = scalar_lea.vmem %s5, %s225
      %s227 = smul.u32 16, %s16
      %v229 = vld [vmem:[%s220] sm:$0xf]
      %v230 = vld [vmem:[%s220 + $0x4] sm:$0xf]
      %v231 = vld [vmem:[%s220 + $0x8] sm:$0xf]
      %v232 = vld [vmem:[%s220 + $0xc] sm:$0xf]
      %v233 = vld [vmem:[%s220 + $0x10] sm:$0xf]
      %v234 = vld [vmem:[%s220 + $0x14] sm:$0xf]
      %v235 = vld [vmem:[%s220 + $0x18] sm:$0xf]
      %v236 = vld [vmem:[%s220 + $0x1c] sm:$0xf]
      %v237 = vld [vmem:[%s220 + $0x20] sm:$0xf]
      %v238 = vld [vmem:[%s220 + $0x24] sm:$0xf]
      %v239 = vld [vmem:[%s220 + $0x28] sm:$0xf]
      %v240 = vld [vmem:[%s220 + $0x2c] sm:$0xf]
      %v241 = vld [vmem:[%s220 + $0x30] sm:$0xf]
      %v242 = vld [vmem:[%s220 + $0x34] sm:$0xf]
      %v243 = vld [vmem:[%s220 + $0x38] sm:$0xf]
      %v244 = vld [vmem:[%s220 + $0x3c] sm:$0xf]
      %v245 = vld [vmem:[%s1] sm:$0xf]
      %v246 = vld [vmem:[%s1 + $0x4] sm:$0xf]
      %v247 = vld [vmem:[%s1 + $0x8] sm:$0xf]
      %v248 = vld [vmem:[%s1 + $0xc] sm:$0xf]
      %v249 = vld [vmem:[%s2] sm:$0x1]
      %v251 = vlaneseq
      %v252 = vshrl.u32 %v251, 7
      %v253 = vsub.s32 0, %v252
      %v254 = vrot.slane %v249, %v253
      %v272 = vunpack.c.l.b16 %v229
      %v273 = vunpack.c.l.b16 %v230
      %v274 = vunpack.c.l.b16 %v231
      %v275 = vunpack.c.l.b16 %v232
      %v276 = vunpack.c.l.b16 %v233
      %v277 = vunpack.c.l.b16 %v234
      %v278 = vunpack.c.l.b16 %v235
      %v279 = vunpack.c.l.b16 %v236
      %v280 = vunpack.c.l.b16 %v237
      %v281 = vunpack.c.l.b16 %v238
      %v282 = vunpack.c.l.b16 %v239
      %v283 = vunpack.c.l.b16 %v240
      %v284 = vunpack.c.l.b16 %v241
      %v285 = vunpack.c.l.b16 %v242
      %v286 = vunpack.c.l.b16 %v243
      %v287 = vunpack.c.l.b16 %v244
      %v288 = vpack.c.b16 %v273, %v272
      %v289 = vpack.c.b16 %v275, %v274
      %v290 = vpack.c.b16 %v277, %v276
      %v291 = vpack.c.b16 %v279, %v278
      %v292 = vpack.c.b16 %v281, %v280
      %v293 = vpack.c.b16 %v283, %v282
      %v294 = vpack.c.b16 %v285, %v284
      %v295 = vpack.c.b16 %v287, %v286
      %v300 = vunpack.c.l.b16 %v245
      %v301 = vunpack.c.l.b16 %v246
      %v302 = vunpack.c.l.b16 %v247
      %v303 = vunpack.c.l.b16 %v248
      %v304 = vpack.c.b16 %v301, %v300
      %v305 = vpack.c.b16 %v303, %v302
      %vm308 = vcmask 261120
      %v310 = vsel %vm308, %v288, 0
      %v313 = vsel %vm308, %v289, 0
      %v316 = vsel %vm308, %v290, 0
      %v319 = vsel %vm308, %v291, 0
      %v322 = vsel %vm308, %v292, 0
      %v325 = vsel %vm308, %v293, 0
      %v328 = vsel %vm308, %v294, 0
      %v331 = vsel %vm308, %v295, 0
      %333 = vmatprep.subr.bf16.mxu0 0
      %334 = vmatpush1.bf16.msra.mxu0 %v304
      %335 = vmatprep.subr.bf16.mxu0 0
      %336 = vmatpush1.bf16.msra.mxu0 %v305
      %337 = vmatprep.subr.bf16.mxu0 0
      %338 = vmatpush1.bf16.msra.mxu0 0
      %339 = vmatprep.subr.bf16.mxu0 0
      %340 = vmatpush1.bf16.msra.mxu0 0
      %341 = vmatprep.subr.bf16.mxu0 0
      %342 = vmatpush1.bf16.msra.mxu0 0
      %343 = vmatprep.subr.bf16.mxu0 0
      %344 = vmatpush1.bf16.msra.mxu0 0
      %345 = vmatprep.subr.bf16.mxu0 0
      %346 = vmatpush1.bf16.msra.mxu0 0
      %347 = vmatprep.subr.bf16.mxu0 0
      %348 = vmatpush1.bf16.msra.mxu0 0
      %349 = vmatprep.subr.bf16.mxu0 0
      %350 = vmatpush1.bf16.msra.mxu0 0
      %351 = vmatprep.subr.bf16.mxu0 0
      %352 = vmatpush1.bf16.msra.mxu0 0
      %353 = vmatprep.subr.bf16.mxu0 0
      %354 = vmatpush1.bf16.msra.mxu0 0
      %355 = vmatprep.subr.bf16.mxu0 0
      %356 = vmatpush1.bf16.msra.mxu0 0
      %357 = vmatprep.subr.bf16.mxu0 0
      %358 = vmatpush1.bf16.msra.mxu0 0
      %359 = vmatprep.subr.bf16.mxu0 0
      %360 = vmatpush1.bf16.msra.mxu0 0
      %361 = vmatprep.subr.bf16.mxu0 0
      %362 = vmatpush1.bf16.msra.mxu0 0
      %363 = vmatprep.subr.bf16.mxu0 0
      %364 = vmatpush1.bf16.msra.mxu0 0
      %365 = vmatprep.mubr.bf16.mxu0 0
      %366 = vmatmul.mubr.bf16.gmra.mrb[0].mxu0 %v310
      %v367 = vpop.f32.mrb[0].mxu0
      %v368 = vadd.f32 %v254, %v367
      %v369 = vpop.f32.mrb[0].mxu0
      %v370 = vpop.f32.mrb[0].mxu0
      %v371 = vadd.f32 %v254, %v370
      %v372 = vpop.f32.mrb[0].mxu0
      %373 = vmatprep.mubr.bf16.mxu0 0
      %374 = vmatmul.mubr.bf16.gmra.mrb[0].mxu0 %v313
      %v375 = vpop.f32.mrb[0].mxu0
      %v376 = vadd.f32 %v254, %v375
      %v377 = vpop.f32.mrb[0].mxu0
      %v378 = vpop.f32.mrb[0].mxu0
      %v379 = vadd.f32 %v254, %v378
      %v380 = vpop.f32.mrb[0].mxu0
      %381 = vmatprep.mubr.bf16.mxu0 0
      %382 = vmatmul.mubr.bf16.gmra.mrb[0].mxu0 %v316
      %v383 = vpop.f32.mrb[0].mxu0
      %v384 = vadd.f32 %v254, %v383
      %v385 = vpop.f32.mrb[0].mxu0
      %v386 = vpop.f32.mrb[0].mxu0
      %v387 = vadd.f32 %v254, %v386
      %v388 = vpop.f32.mrb[0].mxu0
      %389 = vmatprep.mubr.bf16.mxu0 0
      %390 = vmatmul.mubr.bf16.gmra.mrb[0].mxu0 %v319
      %v391 = vpop.f32.mrb[0].mxu0
      %v392 = vadd.f32 %v254, %v391
      %v393 = vpop.f32.mrb[0].mxu0
      %v394 = vpop.f32.mrb[0].mxu0
      %v395 = vadd.f32 %v254, %v394
      %v396 = vpop.f32.mrb[0].mxu0
      %397 = vmatprep.mubr.bf16.mxu0 0
      %398 = vmatmul.mubr.bf16.gmra.mrb[0].mxu0 %v322
      %v399 = vpop.f32.mrb[0].mxu0
      %v400 = vadd.f32 %v254, %v399
      %v401 = vpop.f32.mrb[0].mxu0
      %v402 = vpop.f32.mrb[0].mxu0
      %v403 = vadd.f32 %v254, %v402
      %v404 = vpop.f32.mrb[0].mxu0
      %405 = vmatprep.mubr.bf16.mxu0 0
      %406 = vmatmul.mubr.bf16.gmra.mrb[0].mxu0 %v325
      %v407 = vpop.f32.mrb[0].mxu0
      %v408 = vadd.f32 %v254, %v407
      %v409 = vpop.f32.mrb[0].mxu0
      %v410 = vpop.f32.mrb[0].mxu0
      %v411 = vadd.f32 %v254, %v410
      %v412 = vpop.f32.mrb[0].mxu0
      %413 = vmatprep.mubr.bf16.mxu0 0
      %414 = vmatmul.mubr.bf16.gmra.mrb[0].mxu0 %v328
      %v415 = vpop.f32.mrb[0].mxu0
      %v416 = vadd.f32 %v254, %v415
      %v417 = vpop.f32.mrb[0].mxu0
      %v418 = vpop.f32.mrb[0].mxu0
      %v419 = vadd.f32 %v254, %v418
      %v420 = vpop.f32.mrb[0].mxu0
      %421 = vmatprep.mubr.bf16.mxu0 0
      %422 = vmatmul.mubr.bf16.gmra.mrb[0].mxu0 %v331
      %v423 = vpop.f32.mrb[0].mxu0
      %v424 = vadd.f32 %v254, %v423
      %v425 = vpop.f32.mrb[0].mxu0
      %v426 = vpop.f32.mrb[0].mxu0
      %v427 = vadd.f32 %v254, %v426
      %v428 = vpop.f32.mrb[0].mxu0
      %429 = vdwg.mxu0
      %v430 = vmax.f32 %v368, 0.0
      %v431 = vmax.f32 %v371, 0.0
      %v432 = vmax.f32 %v376, 0.0
      %v433 = vmax.f32 %v379, 0.0
      %v434 = vmax.f32 %v384, 0.0
      %v435 = vmax.f32 %v387, 0.0
      %v436 = vmax.f32 %v392, 0.0
      %v437 = vmax.f32 %v395, 0.0
      %v438 = vmax.f32 %v400, 0.0
      %v439 = vmax.f32 %v403, 0.0
      %v440 = vmax.f32 %v408, 0.0
      %v441 = vmax.f32 %v411, 0.0
      %v442 = vmax.f32 %v416, 0.0
      %v443 = vmax.f32 %v419, 0.0
      %v444 = vmax.f32 %v424, 0.0
      %v445 = vmax.f32 %v427, 0.0
      %v446 = vpack.c.bf16 %v431, %v430
      %v447 = vpack.c.bf16 %v433, %v432
      %v448 = vpack.c.bf16 %v435, %v434
      %v449 = vpack.c.bf16 %v437, %v436
      %v450 = vpack.c.bf16 %v439, %v438
      %v451 = vpack.c.bf16 %v441, %v440
      %v452 = vpack.c.bf16 %v443, %v442
      %v453 = vpack.c.bf16 %v445, %v444
      %v454 = vld [vmem:[%s3] sm:$0xf]
      %v455 = vld [vmem:[%s3 + $0x4] sm:$0xf]
      %v456 = vld [vmem:[%s3 + $0x8] sm:$0xf]
      %v457 = vld [vmem:[%s3 + $0xc] sm:$0xf]
      %v458 = vld [vmem:[%s3 + $0x10] sm:$0xf]
      %v459 = vld [vmem:[%s3 + $0x14] sm:$0xf]
      %v460 = vld [vmem:[%s3 + $0x18] sm:$0xf]
      %v461 = vld [vmem:[%s3 + $0x1c] sm:$0xf]
      %v462 = vld [vmem:[%s4] sm:$0x1]
      %v464 = vlaneseq
      %v465 = vshrl.u32 %v464, 7
      %v466 = vsub.s32 0, %v465
      %v467 = vrot.slane %v462, %v466
      %v477 = vunpack.c.l.b16 %v454
      %v478 = vunpack.c.l.b16 %v455
      %v479 = vunpack.c.l.b16 %v456
      %v480 = vunpack.c.l.b16 %v457
      %v481 = vunpack.c.l.b16 %v458
      %v482 = vunpack.c.l.b16 %v459
      %v483 = vunpack.c.l.b16 %v460
      %v484 = vunpack.c.l.b16 %v461
      %v485 = vpack.c.b16 %v478, %v477
      %v486 = vpack.c.b16 %v480, %v479
      %v487 = vpack.c.b16 %v482, %v481
      %v488 = vpack.c.b16 %v484, %v483
      %vm493 = vcmask 523264
      %v495 = vsel %vm493, %v446, 0
      %v498 = vsel %vm493, %v447, 0
      %v501 = vsel %vm493, %v448, 0
      %v504 = vsel %vm493, %v449, 0
      %v507 = vsel %vm493, %v450, 0
      %v510 = vsel %vm493, %v451, 0
      %v513 = vsel %vm493, %v452, 0
      %v516 = vsel %vm493, %v453, 0
      %518 = vmatprep.subr.bf16.mxu0 0
      %519 = vmatpush1.bf16.msra.mxu0 %v485
      %520 = vmatprep.subr.bf16.mxu0 0
      %521 = vmatpush1.bf16.msra.mxu0 %v486
      %522 = vmatprep.subr.bf16.mxu0 0
      %523 = vmatpush1.bf16.msra.mxu0 %v487
      %524 = vmatprep.subr.bf16.mxu0 0
      %525 = vmatpush1.bf16.msra.mxu0 %v488
      %526 = vmatprep.subr.bf16.mxu0 0
      %527 = vmatpush1.bf16.msra.mxu0 0
      %528 = vmatprep.subr.bf16.mxu0 0
      %529 = vmatpush1.bf16.msra.mxu0 0
      %530 = vmatprep.subr.bf16.mxu0 0
      %531 = vmatpush1.bf16.msra.mxu0 0
      %532 = vmatprep.subr.bf16.mxu0 0
      %533 = vmatpush1.bf16.msra.mxu0 0
      %534 = vmatprep.subr.bf16.mxu0 0
      %535 = vmatpush1.bf16.msra.mxu0 0
      %536 = vmatprep.subr.bf16.mxu0 0
      %537 = vmatpush1.bf16.msra.mxu0 0
      %538 = vmatprep.subr.bf16.mxu0 0
      %539 = vmatpush1.bf16.msra.mxu0 0
      %540 = vmatprep.subr.bf16.mxu0 0
      %541 = vmatpush1.bf16.msra.mxu0 0
      %542 = vmatprep.subr.bf16.mxu0 0
      %543 = vmatpush1.bf16.msra.mxu0 0
      %544 = vmatprep.subr.bf16.mxu0 0
      %545 = vmatpush1.bf16.msra.mxu0 0
      %546 = vmatprep.subr.bf16.mxu0 0
      %547 = vmatpush1.bf16.msra.mxu0 0
      %548 = vmatprep.subr.bf16.mxu0 0
      %549 = vmatpush1.bf16.msra.mxu0 0
      %550 = vmatprep.mubr.bf16.mxu0 0
      %551 = vmatmul.mubr.bf16.gmra.mrb[0].mxu0 %v495
      %v552 = vpop.f32.mrb[0].mxu0
      %v553 = vadd.f32 %v467, %v552
      %v554 = vpop.f32.mrb[0].mxu0
      %v555 = vpop.f32.mrb[0].mxu0
      %v556 = vadd.f32 %v467, %v555
      %v557 = vpop.f32.mrb[0].mxu0
      %558 = vmatprep.mubr.bf16.mxu0 0
      %559 = vmatmul.mubr.bf16.gmra.mrb[0].mxu0 %v498
      %v560 = vpop.f32.mrb[0].mxu0
      %v561 = vadd.f32 %v467, %v560
      %v562 = vpop.f32.mrb[0].mxu0
      %v563 = vpop.f32.mrb[0].mxu0
      %v564 = vadd.f32 %v467, %v563
      %v565 = vpop.f32.mrb[0].mxu0
      %566 = vmatprep.mubr.bf16.mxu0 0
      %567 = vmatmul.mubr.bf16.gmra.mrb[0].mxu0 %v501
      %v568 = vpop.f32.mrb[0].mxu0
      %v569 = vadd.f32 %v467, %v568
      %v570 = vpop.f32.mrb[0].mxu0
      %v571 = vpop.f32.mrb[0].mxu0
      %v572 = vadd.f32 %v467, %v571
      %v573 = vpop.f32.mrb[0].mxu0
      %574 = vmatprep.mubr.bf16.mxu0 0
      %575 = vmatmul.mubr.bf16.gmra.mrb[0].mxu0 %v504
      %v576 = vpop.f32.mrb[0].mxu0
      %v577 = vadd.f32 %v467, %v576
      %v578 = vpop.f32.mrb[0].mxu0
      %v579 = vpop.f32.mrb[0].mxu0
      %v580 = vadd.f32 %v467, %v579
      %v581 = vpop.f32.mrb[0].mxu0
      %582 = vmatprep.mubr.bf16.mxu0 0
      %583 = vmatmul.mubr.bf16.gmra.mrb[0].mxu0 %v507
      %v584 = vpop.f32.mrb[0].mxu0
      %v585 = vadd.f32 %v467, %v584
      %v586 = vpop.f32.mrb[0].mxu0
      %v587 = vpop.f32.mrb[0].mxu0
      %v588 = vadd.f32 %v467, %v587
      %v589 = vpop.f32.mrb[0].mxu0
      %590 = vmatprep.mubr.bf16.mxu0 0
      %591 = vmatmul.mubr.bf16.gmra.mrb[0].mxu0 %v510
      %v592 = vpop.f32.mrb[0].mxu0
      %v593 = vadd.f32 %v467, %v592
      %v594 = vpop.f32.mrb[0].mxu0
      %v595 = vpop.f32.mrb[0].mxu0
      %v596 = vadd.f32 %v467, %v595
      %v597 = vpop.f32.mrb[0].mxu0
      %598 = vmatprep.mubr.bf16.mxu0 0
      %599 = vmatmul.mubr.bf16.gmra.mrb[0].mxu0 %v513
      %v600 = vpop.f32.mrb[0].mxu0
      %v601 = vadd.f32 %v467, %v600
      %v602 = vpop.f32.mrb[0].mxu0
      %v603 = vpop.f32.mrb[0].mxu0
      %v604 = vadd.f32 %v467, %v603
      %v605 = vpop.f32.mrb[0].mxu0
      %606 = vmatprep.mubr.bf16.mxu0 0
      %607 = vmatmul.mubr.bf16.gmra.mrb[0].mxu0 %v516
      %v608 = vpop.f32.mrb[0].mxu0
      %v609 = vadd.f32 %v467, %v608
      %v610 = vpop.f32.mrb[0].mxu0
      %v611 = vpop.f32.mrb[0].mxu0
      %v612 = vadd.f32 %v467, %v611
      %v613 = vpop.f32.mrb[0].mxu0
      %614 = vdwg.mxu0
      %vm615 = vcmask 130048
      %616 = vst.msk [vmem:[%s226] sm:$0xff] %vm615, %v553
      %617 = vst.msk [vmem:[%s226 + $0x8] sm:$0xff] %vm615, %v556
      %618 = vst.msk [vmem:[%s226 + $0x10] sm:$0xff] %vm615, %v561
      %619 = vst.msk [vmem:[%s226 + $0x18] sm:$0xff] %vm615, %v564
      %620 = vst.msk [vmem:[%s226 + $0x20] sm:$0xff] %vm615, %v569
      %621 = vst.msk [vmem:[%s226 + $0x28] sm:$0xff] %vm615, %v572
      %622 = vst.msk [vmem:[%s226 + $0x30] sm:$0xff] %vm615, %v577
      %623 = vst.msk [vmem:[%s226 + $0x38] sm:$0xff] %vm615, %v580
      %624 = vst.msk [vmem:[%s226 + $0x40] sm:$0xff] %vm615, %v585
      %625 = vst.msk [vmem:[%s226 + $0x48] sm:$0xff] %vm615, %v588
      %626 = vst.msk [vmem:[%s226 + $0x50] sm:$0xff] %vm615, %v593
      %627 = vst.msk [vmem:[%s226 + $0x58] sm:$0xff] %vm615, %v596
      %628 = vst.msk [vmem:[%s226 + $0x60] sm:$0xff] %vm615, %v601
      %629 = vst.msk [vmem:[%s226 + $0x68] sm:$0xff] %vm615, %v604
      %630 = vst.msk [vmem:[%s226 + $0x70] sm:$0xff] %vm615, %v609
      %631 = vst.msk [vmem:[%s226 + $0x78] sm:$0xff] %vm615, %v612
      %s632 = smul.u32 16, %s16
      %p633 = scmp.lt.s32.totalorder %s632, 31
      %s634 = scalar_select %p633, %s632, 31
      %s635 = smul.addr %s634, 8
      %s636 = scalar_lea.vmem %s5, %s635
      // Predicated region
      $region41: #{tpu_custom_call.1} parent=39 // pred_check
        %p637 = pneg %p144
      $region42: #{tpu_custom_call.1} parent=39 // pred_check_branch
        %639 = sbr.rel (%p637) target = $region44
      $region43: #{tpu_custom_call.1} parent=39 // pred_region
        %s640 = smul.u32 16, %s16
      $region44: #{tpu_custom_call.1} parent=39 // pred_fallthru
        _
    $region40: #{tpu_custom_call.1} parent=5 // pred_fallthru
      _
    %p641 = scmp.le.s32.totalorder 2, %s11
    // Predicated region
    $region45: #{tpu_custom_call.1} parent=5 // pred_check
      %p642 = pneg %p641
    $region46: #{tpu_custom_call.1} parent=5 // pred_check_branch
      %644 = sbr.rel (%p642) target = $region48
    $region47: #{tpu_custom_call.1} parent=5 // pred_region
      %s645 = ssub.s32 %s11, 2
      // Predicated region
      $region49: #{tpu_custom_call.1} parent=47 // pred_check
        %p646 = pneg %p150
      $region50: #{tpu_custom_call.1} parent=47 // pred_check_branch
        %648 = sbr.rel (%p646) target = $region52
      $region51: #{tpu_custom_call.1} parent=47 // pred_region
        %s649 = smul.u32 16, %s17
        %p650 = scmp.lt.s32.totalorder %s649, 31
        %s651 = scalar_select %p650, %s649, 31
        %s652 = smul.addr %s651, 8
        %s653 = scalar_lea.vmem %s5, %s652
      $region52: #{tpu_custom_call.1} parent=47 // pred_fallthru
        _
    $region48: #{tpu_custom_call.1} parent=5 // pred_fallthru
      _
  $region6: #{tpu_custom_call.1} parent=0 // loop_footer
    %s15 = sadd.s32 1, %s11
  $region7: #{tpu_custom_call.1} parent=0 // loop_footer_branch
    %10 = sbr.rel target = $region3
  $region8: #{tpu_custom_call.1} parent=0 // loop_exit
    _

</llo_original>
